<compile_context>
chip_gen: v5e
topology: v5e:2x2
jax: 0.10.0
libtpu: 0.0.40
codegen_flags: <defaults>
</compile_context>

<pallas_src>
import functools

import jax
import jax.numpy as jnp
from jax.experimental import pallas as pl
from jax.experimental.pallas import tpu as pltpu


def _round_up(n, m):
    return ((n + m - 1) // m) * m


def _choose_batch_tile(B, max_tile=512, align=16):
    """Adaptive batch tile: fewest steps with tiles <= max_tile, minimal zero
    padding, and >= 2 steps when the batch is large enough (v7x megacore)."""
    n_steps = max(-(-B // max_tile), 1)
    if n_steps == 1 and B >= 2 * align:
        n_steps = 2          # give both TensorCores work on v7x
    tile = _round_up(-(-B // n_steps), align)
    b_pad = _round_up(B, tile)
    return tile, b_pad


def _mlp_kernel(x_ref, w1_ref, b1_ref, w2_ref, b2_ref, w3_ref, b3_ref, o_ref):
    # Layer 1: Linear (bf16 operands on the MXU, f32 accumulate + bias) + ReLU.
    h1 = b1_ref[...] + jnp.dot(x_ref[...], w1_ref[...],
                               preferred_element_type=jnp.float32)
    h1 = jnp.maximum(h1.astype(jnp.bfloat16), 0.0)   # ReLU in bf16 (half VALU)
    # Layer 2: Linear + ReLU.
    h2 = b2_ref[...] + jnp.dot(h1, w2_ref[...],
                               preferred_element_type=jnp.float32)
    h2 = jnp.maximum(h2.astype(jnp.bfloat16), 0.0)
    # Output layer: Linear (output_activation=None), lane-dense 128-wide.
    out = b3_ref[...] + jnp.dot(h2, w3_ref[...],
                                preferred_element_type=jnp.float32)
    o_ref[...] = out.astype(o_ref.dtype)


@functools.partial(jax.jit, static_argnames=("out_dim",))
def net_forward(x, w1, b1, w2, b2, w3, b3, *, out_dim):
    B, in_dim = x.shape
    out_pad = w3.shape[1]

    # bf16 input in the wrapper: halves x DMA, identical numerics to casting
    # inside the kernel (the reference already quantizes x to bf16).
    x = x.astype(jnp.bfloat16)

    tile_b, b_pad = _choose_batch_tile(B)
    if b_pad != B:
        x = jnp.pad(x, ((0, b_pad - B), (0, 0)))
    grid = (b_pad // tile_b,)

    x_spec = pl.BlockSpec((tile_b, in_dim), lambda i: (i, 0))
    # Constant block index across the grid -> weights/biases stay resident in
    # VMEM for the whole call (one DMA per array per call).
    # (pl.Buffered(1) on these would shave ~340 KiB of VMEM; skipped — budget
    #  is nowhere near tight at these sizes.)
    full = lambda a: pl.BlockSpec(a.shape, lambda i: (0,) * a.ndim)
    out_spec = pl.BlockSpec((tile_b, out_pad), lambda i: (i, 0))

    out = pl.pallas_call(
        _mlp_kernel,
        out_shape=jax.ShapeDtypeStruct((b_pad, out_pad), jnp.float32),
        grid_spec=pltpu.PrefetchScalarGridSpec(
            num_scalar_prefetch=0,
            grid=grid,
            in_specs=[x_spec,
                      full(w1), full(b1),
                      full(w2), full(b2),
                      full(w3), full(b3)],
            out_specs=out_spec,
        ),
        compiler_params=pltpu.CompilerParams(
            dimension_semantics=("parallel",),
            vmem_limit_bytes=32 << 20,   # explicit; fits v7x 64 MiB and v5e/v6e
        ),
    )(x, w1, b1, w2, b2, w3, b3)
    return out[:B, :out_dim]


def init_linear(key, in_features, out_features):
    """Deterministic PyTorch-style Linear init: U(-1/sqrt(fan_in), 1/sqrt(fan_in)).
    Returns weight as (in, out) (i.e. W.T) and bias as (1, out)."""
    kw, kb = jax.random.split(key)
    bound = 1.0 / jnp.sqrt(jnp.float32(in_features))
    w = jax.random.uniform(kw, (in_features, out_features), jnp.float32, -bound, bound)
    b = jax.random.uniform(kb, (1, out_features), jnp.float32, -bound, bound)
    return w, b


def build_net_params(key, input_size, output_sizes, hidden_sizes=(400, 300)):
    """Builds (padded bf16 kernel params, raw f32 params) for Net(...).

    Multi-head SplitNet final layers (output_activation=None) are fused into a
    single Linear by concatenating per-head weights along the output axis.
    Hidden dims are padded only to a multiple of 16 (bf16 sublane packing);
    the output dim is zero-padded to 128 for a lane-dense output tile.  All
    padding is transparent: ReLU(0)=0 and zero weight rows contribute nothing.
    Weights are cast to bf16, biases stay f32.
    """
    keys = jax.random.split(key, 2 + len(output_sizes))
    w1, b1 = init_linear(keys[0], input_size, hidden_sizes[0])
    w2, b2 = init_linear(keys[1], hidden_sizes[0], hidden_sizes[1])
    head_ws, head_bs = [], []
    for i, osz in enumerate(output_sizes):
        wi, bi = init_linear(keys[2 + i], hidden_sizes[1], osz)
        head_ws.append(wi)
        head_bs.append(bi)
    w3 = jnp.concatenate(head_ws, axis=1)
    b3 = jnp.concatenate(head_bs, axis=1)
    raw = (w1, b1, w2, b2, w3, b3)

    h1p = _round_up(hidden_sizes[0], 16)        # 400 -> 400
    h2p = _round_up(hidden_sizes[1], 16)        # 300 -> 304
    out_dim = sum(output_sizes)
    outp = _round_up(out_dim, 128)              # lane-dense output

    w1p = jnp.pad(w1, ((0, 0), (0, h1p - hidden_sizes[0]))).astype(jnp.bfloat16)
    b1p = jnp.pad(b1, ((0, 0), (0, h1p - hidden_sizes[0])))
    w2p = jnp.pad(w2, ((0, h1p - hidden_sizes[0]),
                       (0, h2p - hidden_sizes[1]))).astype(jnp.bfloat16)
    b2p = jnp.pad(b2, ((0, 0), (0, h2p - hidden_sizes[1])))
    w3p = jnp.pad(w3, ((0, h2p - hidden_sizes[1]),
                       (0, outp - out_dim))).astype(jnp.bfloat16)
    b3p = jnp.pad(b3, ((0, 0), (0, outp - out_dim)))
    padded = (w1p, b1p, w2p, b2p, w3p, b3p)
    return padded, raw


def reference_forward_f32(x, w1, b1, w2, b2, w3, b3):
    """Original-module semantics (f32, unpadded)."""
    h1 = jnp.maximum(x @ w1 + b1, 0.0)
    h2 = jnp.maximum(h1 @ w2 + b2, 0.0)
    return h2 @ w3 + b3


def reference_forward_padded(x, w1, b1, w2, b2, w3, b3, out_dim):
    """Same numerics as the kernel (bf16 operands, f32 accumulation)."""
    xb = x.astype(jnp.bfloat16)
    h1 = jnp.dot(xb, w1, preferred_element_type=jnp.float32) + b1
    h1 = jnp.maximum(h1.astype(jnp.bfloat16), 0.0)
    h2 = jnp.dot(h1, w2, preferred_element_type=jnp.float32) + b2
    h2 = jnp.maximum(h2.astype(jnp.bfloat16), 0.0)
    out = jnp.dot(h2, w3, preferred_element_type=jnp.float32) + b3
    return out[:, :out_dim]


if __name__ == "__main__":
    key = jax.random.PRNGKey(0)
    k_x, k_p = jax.random.split(key)

    batch = 8
    input_size = 32
    hidden_sizes = (400, 300)   # module defaults
    output_sizes = (6,)         # single head -> plain Linear final layer
    out_dim = sum(output_sizes)

    x = jax.random.normal(k_x, (batch, input_size), dtype=jnp.float32)
    padded, raw = build_net_params(k_p, input_size, output_sizes, hidden_sizes)

    out = net_forward(x, *padded, out_dim=out_dim)
    out = jax.block_until_ready(out)
    assert out.shape == (batch, out_dim), out.shape

    # Exact-math reference (same padded bf16 weights / bf16 intermediates).
    ref_pad = reference_forward_padded(x, *padded, out_dim)
    assert jnp.allclose(out, ref_pad, atol=2e-3, rtol=2e-3), "mismatch vs bf16 reference"

    # Semantic reference vs the original (unpadded, f32) parameters; tolerance
    # loosened for bf16 weight quantization.
    ref_f32 = reference_forward_f32(x, *raw)
    assert jnp.allclose(out, ref_f32, atol=5e-2, rtol=5e-2), "mismatch vs f32 reference"

    # Exercise a larger, non-tile-aligned batch to cover the multi-step grid
    # path (adaptive tile + >=2 parallel steps for v7x).
    x_big = jax.random.normal(k_x, (129, input_size), dtype=jnp.float32)
    out_big = jax.block_until_ready(net_forward(x_big, *padded, out_dim=out_dim))
    ref_big = reference_forward_padded(x_big, *padded, out_dim)
    assert out_big.shape == (129, out_dim)
    assert jnp.allclose(out_big, ref_big, atol=2e-3, rtol=2e-3), "mismatch (big batch)"

    print("KERNEL_OK")
</pallas_src>

<mosaic_0001>
module attributes {stable_mosaic.version = 11 : i64} {
  func.func @_mlp_kernel(%arg0: i32, %arg1: memref<16x32xbf16, #tpu.memory_space<vmem>>, %arg2: memref<32x400xbf16, #tpu.memory_space<vmem>>, %arg3: memref<1x400xf32, #tpu.memory_space<vmem>>, %arg4: memref<400x304xbf16, #tpu.memory_space<vmem>>, %arg5: memref<1x304xf32, #tpu.memory_space<vmem>>, %arg6: memref<304x128xbf16, #tpu.memory_space<vmem>>, %arg7: memref<1x128xf32, #tpu.memory_space<vmem>>, %arg8: memref<16x128xf32, #tpu.memory_space<vmem>>) attributes {dimension_semantics = [#tpu.dimension_semantics<parallel>], iteration_bounds = array<i64: 1>, scalar_prefetch = 0 : i64, scratch_operands = 0 : i64, tpu.core_type = #tpu.core_type<tc>, window_params = [{transform_indices = @transform_0, window_bounds = array<i64: 16, 32>}, {pipeline_mode = #tpu.pipeline_mode<synchronous>, transform_indices = @transform_1, window_bounds = array<i64: 32, 400>}, {pipeline_mode = #tpu.pipeline_mode<synchronous>, transform_indices = @transform_2, window_bounds = array<i64: 1, 400>}, {pipeline_mode = #tpu.pipeline_mode<synchronous>, transform_indices = @transform_3, window_bounds = array<i64: 400, 304>}, {pipeline_mode = #tpu.pipeline_mode<synchronous>, transform_indices = @transform_4, window_bounds = array<i64: 1, 304>}, {pipeline_mode = #tpu.pipeline_mode<synchronous>, transform_indices = @transform_5, window_bounds = array<i64: 304, 128>}, {pipeline_mode = #tpu.pipeline_mode<synchronous>, transform_indices = @transform_6, window_bounds = array<i64: 1, 128>}, {transform_indices = @transform_7, window_bounds = array<i64: 16, 128>}]} {
    %c0 = arith.constant 0 : index
    %c0_0 = arith.constant 0 : index
    %0 = vector.load %arg3[%c0, %c0_0] : memref<1x400xf32, #tpu.memory_space<vmem>>, vector<1x400xf32>
    %c0_1 = arith.constant 0 : index
    %c0_2 = arith.constant 0 : index
    %1 = vector.load %arg1[%c0_1, %c0_2] : memref<16x32xbf16, #tpu.memory_space<vmem>>, vector<16x32xbf16>
    %c0_3 = arith.constant 0 : index
    %c0_4 = arith.constant 0 : index
    %2 = vector.load %arg2[%c0_3, %c0_4] : memref<32x400xbf16, #tpu.memory_space<vmem>>, vector<32x400xbf16>
    %cst = arith.constant dense<0.000000e+00> : vector<16x400xf32>
    %3 = tpu.matmul %1, %2, %cst {dimension_numbers = #tpu.dot_dimension_numbers<[1], [0], [0], [1], [0, 0, 1, 1], [], []>} : vector<16x32xbf16>, vector<32x400xbf16>, vector<16x400xf32> -> vector<16x400xf32>
    %4 = vector.broadcast %0 : vector<1x400xf32> to vector<16x400xf32>
    %5 = arith.addf %4, %3 : vector<16x400xf32>
    %6 = arith.truncf %5 : vector<16x400xf32> to vector<16x400xbf16>
    %cst_5 = arith.constant 0.000000e+00 : bf16
    %7 = vector.broadcast %cst_5 : bf16 to vector<16x400xbf16>
    %8 = arith.maximumf %6, %7 : vector<16x400xbf16>
    %c0_6 = arith.constant 0 : index
    %c0_7 = arith.constant 0 : index
    %9 = vector.load %arg5[%c0_6, %c0_7] : memref<1x304xf32, #tpu.memory_space<vmem>>, vector<1x304xf32>
    %c0_8 = arith.constant 0 : index
    %c0_9 = arith.constant 0 : index
    %10 = vector.load %arg4[%c0_8, %c0_9] : memref<400x304xbf16, #tpu.memory_space<vmem>>, vector<400x304xbf16>
    %cst_10 = arith.constant dense<0.000000e+00> : vector<16x304xf32>
    %11 = tpu.matmul %8, %10, %cst_10 {dimension_numbers = #tpu.dot_dimension_numbers<[1], [0], [0], [1], [0, 0, 1, 1], [], []>} : vector<16x400xbf16>, vector<400x304xbf16>, vector<16x304xf32> -> vector<16x304xf32>
    %12 = vector.broadcast %9 : vector<1x304xf32> to vector<16x304xf32>
    %13 = arith.addf %12, %11 : vector<16x304xf32>
    %14 = arith.truncf %13 : vector<16x304xf32> to vector<16x304xbf16>
    %cst_11 = arith.constant 0.000000e+00 : bf16
    %15 = vector.broadcast %cst_11 : bf16 to vector<16x304xbf16>
    %16 = arith.maximumf %14, %15 : vector<16x304xbf16>
    %c0_12 = arith.constant 0 : index
    %c0_13 = arith.constant 0 : index
    %17 = vector.load %arg7[%c0_12, %c0_13] : memref<1x128xf32, #tpu.memory_space<vmem>>, vector<1x128xf32>
    %c0_14 = arith.constant 0 : index
    %c0_15 = arith.constant 0 : index
    %18 = vector.load %arg6[%c0_14, %c0_15] : memref<304x128xbf16, #tpu.memory_space<vmem>>, vector<304x128xbf16>
    %cst_16 = arith.constant dense<0.000000e+00> : vector<16x128xf32>
    %19 = tpu.matmul %16, %18, %cst_16 {dimension_numbers = #tpu.dot_dimension_numbers<[1], [0], [0], [1], [0, 0, 1, 1], [], []>} : vector<16x304xbf16>, vector<304x128xbf16>, vector<16x128xf32> -> vector<16x128xf32>
    %20 = vector.broadcast %17 : vector<1x128xf32> to vector<16x128xf32>
    %21 = arith.addf %20, %19 : vector<16x128xf32>
    %c0_17 = arith.constant 0 : index
    %c0_18 = arith.constant 0 : index
    %22 = vector.load %arg8[%c0_17, %c0_18] : memref<16x128xf32, #tpu.memory_space<vmem>>, vector<16x128xf32>
    tpu.vector_store %arg8[%c0_17, %c0_18], %21 {strides = array<i32>} : memref<16x128xf32, #tpu.memory_space<vmem>>, vector<16x128xf32>,
    return
  }
  func.func @transform_0(%arg0: i32) -> (i32, i32) {
    %c0_i32 = arith.constant 0 : i32
    %c0_i32_0 = arith.constant 0 : i32
    return %arg0, %c0_i32 : i32, i32
  }
  func.func @transform_1(%arg0: i32) -> (i32, i32) {
    %c0_i32 = arith.constant 0 : i32
    %c0_i32_0 = arith.constant 0 : i32
    %c0_i32_1 = arith.constant 0 : i32
    return %c0_i32, %c0_i32_0 : i32, i32
  }
  func.func @transform_2(%arg0: i32) -> (i32, i32) {
    %c0_i32 = arith.constant 0 : i32
    %c0_i32_0 = arith.constant 0 : i32
    %c0_i32_1 = arith.constant 0 : i32
    return %c0_i32, %c0_i32_0 : i32, i32
  }
  func.func @transform_3(%arg0: i32) -> (i32, i32) {
    %c0_i32 = arith.constant 0 : i32
    %c0_i32_0 = arith.constant 0 : i32
    %c0_i32_1 = arith.constant 0 : i32
    return %c0_i32, %c0_i32_0 : i32, i32
  }
  func.func @transform_4(%arg0: i32) -> (i32, i32) {
    %c0_i32 = arith.constant 0 : i32
    %c0_i32_0 = arith.constant 0 : i32
    %c0_i32_1 = arith.constant 0 : i32
    return %c0_i32, %c0_i32_0 : i32, i32
  }
  func.func @transform_5(%arg0: i32) -> (i32, i32) {
    %c0_i32 = arith.constant 0 : i32
    %c0_i32_0 = arith.constant 0 : i32
    %c0_i32_1 = arith.constant 0 : i32
    return %c0_i32, %c0_i32_0 : i32, i32
  }
  func.func @transform_6(%arg0: i32) -> (i32, i32) {
    %c0_i32 = arith.constant 0 : i32
    %c0_i32_0 = arith.constant 0 : i32
    %c0_i32_1 = arith.constant 0 : i32
    return %c0_i32, %c0_i32_0 : i32, i32
  }
  func.func @transform_7(%arg0: i32) -> (i32, i32) {
    %c0_i32 = arith.constant 0 : i32
    %c0_i32_0 = arith.constant 0 : i32
    return %arg0, %c0_i32 : i32, i32
  }
}

</mosaic_0001>

<llo_original>
// kernel: net_forward.1
$region0: #{net_forward.1}
  #allocation0 [shape = 'u32[]', space=smem, size = 0x4, offset = 0x4, fixed_abs, tag = 'smem constant byte address 0x4 - core index']
  #allocation1 [shape = 'u32[72,128]{1,0:T(1,128)}', space=vmem, size = 0x9000, scoped, tag = 'internal scratch']
  %s0 = inlined_call_operand.vmem [shape: bf16[16,32], index: 0, kind: input, shape index: {}]
  %s1 = inlined_call_operand.hbm [shape: bf16[32,400], index: 1, kind: input, shape index: {}]
  %s2 = inlined_call_operand.vmem [shape: f32[1,400], index: 2, kind: input, shape index: {}]
  %s3 = inlined_call_operand.hbm [shape: bf16[400,304], index: 3, kind: input, shape index: {}]
  %s4 = inlined_call_operand.vmem [shape: f32[1,304], index: 4, kind: input, shape index: {}]
  %s5 = inlined_call_operand.hbm [shape: bf16[304,128], index: 5, kind: input, shape index: {}]
  %s6 = inlined_call_operand.vmem [shape: f32[1,128], index: 6, kind: input, shape index: {}]
  %s7 = inlined_call_operand.vmem [shape: f32[16,128], index: 7, kind: output, shape index: {}]
  %s8 = sld [smem:[#allocation0]]
  $region50: #{net_forward.1} parent=0
    _
  %s10 = ssub.s32 1, %s8
  %s11 = scalar_select 0, %s10, %s8
  $region1: #{net_forward.1} parent=0
    #allocation2 [shape = 'u8[32768]{0}', space=vmem, size = 0x8000, scoped, tag = 'input window, operand 1, single buffered']
    #allocation3 [shape = 's32[1]{0}', space=sflag, size = 0x4, scoped, tag = 'scoped memory for net_forward.1']
    #allocation4 [shape = 'u8[307200]{0}', space=vmem, size = 0x4b000, scoped, tag = 'input window, operand 3, single buffered']
    #allocation5 [shape = 's32[1]{0}', space=sflag, size = 0x4, scoped, tag = 'scoped memory for net_forward.1']
    #allocation6 [shape = 'u8[77824]{0}', space=vmem, size = 0x13000, scoped, tag = 'input window, operand 5, single buffered']
    %12 = vsyncpa [#allocation3], 0
    %13 = vsyncpa [#allocation5], 0
    // Predicated region
    $region2: #{net_forward.1} parent=1 // pred_check
      _
    $region3: #{net_forward.1} parent=1 // pred_check_branch
      %15 = sbr.rel (0) target = $region5
    $region4: #{net_forward.1} parent=1 // pred_region
      _
    $region5: #{net_forward.1} parent=1 // pred_fallthru
      _
    // Predicated region
    $region6: #{net_forward.1} parent=1 // pred_check
      _
    $region7: #{net_forward.1} parent=1 // pred_check_branch
      %17 = sbr.rel (0) target = $region9
    $region8: #{net_forward.1} parent=1 // pred_region
      %19 = vsyncadd [#allocation3], 0
      %s20 = sshll.u32 %s1, 4
      %s21 = int_to_ptr.hbm [resolvable:$true] %s20
      %s22 = sshll.u32 [#allocation2], 4
      %s23 = int_to_ptr.vmem [resolvable:$true] %s22
      %28 = dma.hbm_to_vmem [thread:$0]  %s21, 1024, %s23, [#allocation3], 256, 256, 16
    $region9: #{net_forward.1} parent=1 // pred_fallthru
      _
    // Predicated region
    $region10: #{net_forward.1} parent=1 // pred_check
      _
    $region11: #{net_forward.1} parent=1 // pred_check_branch
      %30 = sbr.rel (0) target = $region13
    $region12: #{net_forward.1} parent=1 // pred_region
      _
    $region13: #{net_forward.1} parent=1 // pred_fallthru
      _
    // Predicated region
    $region14: #{net_forward.1} parent=1 // pred_check
      _
    $region15: #{net_forward.1} parent=1 // pred_check_branch
      %32 = sbr.rel (0) target = $region17
    $region16: #{net_forward.1} parent=1 // pred_region
      %34 = vsyncadd [#allocation5], 0
      %s35 = sshll.u32 %s3, 4
      %s36 = int_to_ptr.hbm [resolvable:$true] %s35
      %s37 = sshll.u32 [#allocation4], 4
      %s38 = int_to_ptr.vmem [resolvable:$true] %s37
      %43 = dma.hbm_to_vmem [thread:$0]  %s36, 9600, %s38, [#allocation5], 192, 192, 12
    $region17: #{net_forward.1} parent=1 // pred_fallthru
      _
    // Predicated region
    $region18: #{net_forward.1} parent=1 // pred_check
      _
    $region19: #{net_forward.1} parent=1 // pred_check_branch
      %45 = sbr.rel (0) target = $region21
    $region20: #{net_forward.1} parent=1 // pred_region
      _
    $region21: #{net_forward.1} parent=1 // pred_fallthru
      _
    // Predicated region
    $region22: #{net_forward.1} parent=1 // pred_check
      _
    $region23: #{net_forward.1} parent=1 // pred_check_branch
      %47 = sbr.rel (0) target = $region25
    $region24: #{net_forward.1} parent=1 // pred_region
      %49 = vsyncadd [#allocation5], 0
      %s50 = sshll.u32 %s5, 4
      %s51 = int_to_ptr.hbm [resolvable:$true] %s50
      %s52 = sshll.u32 [#allocation6], 4
      %s53 = int_to_ptr.vmem [resolvable:$true] %s52
      %58 = dma.hbm_to_vmem [thread:$0]  %s51, 2432, %s53, [#allocation5], 64, 64, 4
    $region25: #{net_forward.1} parent=1 // pred_fallthru
      _
    // Predicated region
    $region26: #{net_forward.1} parent=1 // pred_check
      _
    $region27: #{net_forward.1} parent=1 // pred_check_branch
      %60 = sbr.rel (0) target = $region29
    $region28: #{net_forward.1} parent=1 // pred_region
      _
    $region29: #{net_forward.1} parent=1 // pred_fallthru
      _
    // Predicated region
    $region30: #{net_forward.1} parent=1 // pred_check
      _
    $region31: #{net_forward.1} parent=1 // pred_check_branch
      %62 = sbr.rel (0) target = $region33
    $region32: #{net_forward.1} parent=1 // pred_region
      %64 = dma.done [#allocation3], 1024
    $region33: #{net_forward.1} parent=1 // pred_fallthru
      _
    // Predicated region
    $region34: #{net_forward.1} parent=1 // pred_check
      _
    $region35: #{net_forward.1} parent=1 // pred_check_branch
      %66 = sbr.rel (0) target = $region37
    $region36: #{net_forward.1} parent=1 // pred_region
      %68 = dma.done [#allocation5], 9600
    $region37: #{net_forward.1} parent=1 // pred_fallthru
      _
    // Predicated region
    $region38: #{net_forward.1} parent=1 // pred_check
      _
    $region39: #{net_forward.1} parent=1 // pred_check_branch
      %70 = sbr.rel (0) target = $region41
    $region40: #{net_forward.1} parent=1 // pred_region
      %72 = dma.done [#allocation5], 2432
    $region41: #{net_forward.1} parent=1 // pred_fallthru
      _
    %v74 = vld [vmem:[%s2] sm:$0xf]
    %v75 = vld [vmem:[%s0] sm:$0xf]
    %v76 = vld [vmem:[%s0 + $0x4] sm:$0xf]
    %v77 = vld [vmem:[#allocation2] sm:$0xff]
    %v78 = vld [vmem:[#allocation2 + $0x8] sm:$0xff]
    %v79 = vld [vmem:[#allocation2 + $0x10] sm:$0xff]
    %v80 = vld [vmem:[#allocation2 + $0x18] sm:$0xff]
    %v81 = vld [vmem:[#allocation2 + $0x20] sm:$0xff]
    %v82 = vld [vmem:[#allocation2 + $0x28] sm:$0xff]
    %v83 = vld [vmem:[#allocation2 + $0x30] sm:$0xff]
    %v84 = vld [vmem:[#allocation2 + $0x38] sm:$0xff]
    %v87 = vunpack.c.l.b16 %v75
    %v88 = vunpack.c.l.b16 %v76
    %v89 = vpack.c.b16 %v88, %v87
    %v98 = vunpack.c.l.b16 %v77
    %v99 = vunpack.c.h.b16 %v77
    %v100 = vunpack.c.l.b16 %v78
    %v101 = vunpack.c.h.b16 %v78
    %v102 = vunpack.c.l.b16 %v79
    %v103 = vunpack.c.h.b16 %v79
    %v104 = vunpack.c.l.b16 %v80
    %v105 = vunpack.c.h.b16 %v80
    %v106 = vunpack.c.l.b16 %v81
    %v107 = vunpack.c.h.b16 %v81
    %v108 = vunpack.c.l.b16 %v82
    %v109 = vunpack.c.h.b16 %v82
    %v110 = vunpack.c.l.b16 %v83
    %v111 = vunpack.c.h.b16 %v83
    %v112 = vunpack.c.l.b16 %v84
    %v113 = vunpack.c.h.b16 %v84
    %v114 = vpack.c.b16 %v102, %v98
    %v115 = vpack.c.b16 %v103, %v99
    %v116 = vpack.c.b16 %v104, %v100
    %v117 = vpack.c.b16 %v105, %v101
    %v118 = vpack.c.b16 %v110, %v106
    %v119 = vpack.c.b16 %v111, %v107
    %v120 = vpack.c.b16 %v112, %v108
    %v121 = vpack.c.b16 %v113, %v109
    %vm130 = vcmask 261120
    %v132 = vsel %vm130, %v89, 0
    %134 = vmatpush.bf16.msra.mxu0 0
    %135 = vmatpush.bf16.msra.mxu0 0
    %136 = vmatpush.bf16.msra.mxu0 0
    %137 = vmatpush.bf16.msra.mxu0 0
    %138 = vmatpush.bf16.msra.mxu0 0
    %139 = vmatpush.bf16.msra.mxu0 0
    %140 = vmatpush.bf16.msra.mxu0 %v118
    %141 = vmatpush.bf16.msra.mxu0 %v114
    %142 = vmatmul.bf16.gmra.mxu0 %v132
    %v143 = vpop.f32.mrf.mxu0
    %v144 = vadd.f32 0.0, %v143
    %v145 = vpop.f32.mrf.mxu0
    %v146 = vadd.f32 0.0, %v145
    %147 = vdwg.mxu0
    %148 = vmatpush.bf16.msra.mxu0 0
    %149 = vmatpush.bf16.msra.mxu0 0
    %150 = vmatpush.bf16.msra.mxu0 0
    %151 = vmatpush.bf16.msra.mxu0 0
    %152 = vmatpush.bf16.msra.mxu0 0
    %153 = vmatpush.bf16.msra.mxu0 0
    %154 = vmatpush.bf16.msra.mxu0 %v119
    %155 = vmatpush.bf16.msra.mxu0 %v115
    %156 = vmatmul.bf16.gmra.mxu0 %v132
    %v157 = vpop.f32.mrf.mxu0
    %v158 = vadd.f32 0.0, %v157
    %v159 = vpop.f32.mrf.mxu0
    %v160 = vadd.f32 0.0, %v159
    %161 = vdwg.mxu0
    %162 = vmatpush.bf16.msra.mxu0 0
    %163 = vmatpush.bf16.msra.mxu0 0
    %164 = vmatpush.bf16.msra.mxu0 0
    %165 = vmatpush.bf16.msra.mxu0 0
    %166 = vmatpush.bf16.msra.mxu0 0
    %167 = vmatpush.bf16.msra.mxu0 0
    %168 = vmatpush.bf16.msra.mxu0 %v120
    %169 = vmatpush.bf16.msra.mxu0 %v116
    %170 = vmatmul.bf16.gmra.mxu0 %v132
    %v171 = vpop.f32.mrf.mxu0
    %v172 = vadd.f32 0.0, %v171
    %v173 = vpop.f32.mrf.mxu0
    %v174 = vadd.f32 0.0, %v173
    %175 = vdwg.mxu0
    %176 = vmatpush.bf16.msra.mxu0 0
    %177 = vmatpush.bf16.msra.mxu0 0
    %178 = vmatpush.bf16.msra.mxu0 0
    %179 = vmatpush.bf16.msra.mxu0 0
    %180 = vmatpush.bf16.msra.mxu0 0
    %181 = vmatpush.bf16.msra.mxu0 0
    %182 = vmatpush.bf16.msra.mxu0 %v121
    %183 = vmatpush.bf16.msra.mxu0 %v117
    %184 = vmatmul.bf16.gmra.mxu0 %v132
    %v185 = vpop.f32.mrf.mxu0
    %v186 = vadd.f32 0.0, %v185
    %v187 = vpop.f32.mrf.mxu0
    %v188 = vadd.f32 0.0, %v187
    %189 = vdwg.mxu0
    %v191 = vperm.slane %v74, 0
    %v192 = vperm.slane %v74, 1
    %v193 = vperm.slane %v74, 2
    %v194 = vperm.slane %v74, 3
    %v199 = vadd.f32 %v191, %v144
    %v200 = vadd.f32 %v192, %v158
    %v201 = vadd.f32 %v193, %v172
    %v202 = vadd.f32 %v194, %v186
    %v203 = vadd.f32 %v191, %v146
    %v204 = vadd.f32 %v192, %v160
    %v205 = vadd.f32 %v193, %v174
    %v206 = vadd.f32 %v194, %v188
    %v207 = vpack.c.bf16 %v200, %v199
    %v208 = vpack.c.bf16 %v202, %v201
    %v209 = vpack.c.bf16 %v204, %v203
    %v210 = vpack.c.bf16 %v206, %v205
    %v211 = vunpack.c.l.bf16 %v207
    %v212 = vunpack.c.h.bf16 %v207
    %v213 = vunpack.c.l.bf16 %v208
    %v214 = vunpack.c.h.bf16 %v208
    %v215 = vunpack.c.l.bf16 %v209
    %v216 = vunpack.c.h.bf16 %v209
    %v217 = vunpack.c.l.bf16 %v210
    %v218 = vunpack.c.h.bf16 %v210
    %v219 = vmax.f32 %v211, 0.0
    %v220 = vmax.f32 %v212, 0.0
    %v221 = vmax.f32 %v213, 0.0
    %v222 = vmax.f32 %v214, 0.0
    %v223 = vmax.f32 %v215, 0.0
    %v224 = vmax.f32 %v216, 0.0
    %v225 = vmax.f32 %v217, 0.0
    %v226 = vmax.f32 %v218, 0.0
    %v227 = vpack.c.bf16 %v223, %v219
    %v228 = vpack.c.bf16 %v224, %v220
    %v229 = vpack.c.bf16 %v225, %v221
    %v230 = vpack.c.bf16 %v226, %v222
    %v231 = vld [vmem:[%s4] sm:$0x7]
    %v232 = vld [vmem:[#allocation4] sm:$0xff]
    %v233 = vld [vmem:[#allocation4 + $0x8] sm:$0xf]
    %v234 = vld [vmem:[#allocation4 + $0xc] sm:$0xff]
    %v235 = vld [vmem:[#allocation4 + $0x14] sm:$0xf]
    %v236 = vld [vmem:[#allocation4 + $0x18] sm:$0xff]
    %v237 = vld [vmem:[#allocation4 + $0x20] sm:$0xf]
    %v238 = vld [vmem:[#allocation4 + $0x24] sm:$0xff]
    %v239 = vld [vmem:[#allocation4 + $0x2c] sm:$0xf]
    %v240 = vld [vmem:[#allocation4 + $0x30] sm:$0xff]
    %v241 = vld [vmem:[#allocation4 + $0x38] sm:$0xf]
    %v242 = vld [vmem:[#allocation4 + $0x3c] sm:$0xff]
    %v243 = vld [vmem:[#allocation4 + $0x44] sm:$0xf]
    %v244 = vld [vmem:[#allocation4 + $0x48] sm:$0xff]
    %v245 = vld [vmem:[#allocation4 + $0x50] sm:$0xf]
    %v246 = vld [vmem:[#allocation4 + $0x54] sm:$0xff]
    %v247 = vld [vmem:[#allocation4 + $0x5c] sm:$0xf]
    %v248 = vld [vmem:[#allocation4 + $0x60] sm:$0xff]
    %v249 = vld [vmem:[#allocation4 + $0x68] sm:$0xf]
    %v250 = vld [vmem:[#allocation4 + $0x6c] sm:$0xff]
    %v251 = vld [vmem:[#allocation4 + $0x74] sm:$0xf]
    %v252 = vld [vmem:[#allocation4 + $0x78] sm:$0xff]
    %v253 = vld [vmem:[#allocation4 + $0x80] sm:$0xf]
    %v254 = vld [vmem:[#allocation4 + $0x84] sm:$0xff]
    %v255 = vld [vmem:[#allocation4 + $0x8c] sm:$0xf]
    %v256 = vld [vmem:[#allocation4 + $0x90] sm:$0xff]
    %v257 = vld [vmem:[#allocation4 + $0x98] sm:$0xf]
    %v258 = vld [vmem:[#allocation4 + $0x9c] sm:$0xff]
    %v259 = vld [vmem:[#allocation4 + $0xa4] sm:$0xf]
    %v260 = vld [vmem:[#allocation4 + $0xa8] sm:$0xff]
    %v261 = vld [vmem:[#allocation4 + $0xb0] sm:$0xf]
    %v262 = vld [vmem:[#allocation4 + $0xb4] sm:$0xff]
    %v263 = vld [vmem:[#allocation4 + $0xbc] sm:$0xf]
    %v264 = vld [vmem:[#allocation4 + $0xc0] sm:$0xff]
    %v265 = vld [vmem:[#allocation4 + $0xc8] sm:$0xf]
    %v266 = vld [vmem:[#allocation4 + $0xcc] sm:$0xff]
    %v267 = vld [vmem:[#allocation4 + $0xd4] sm:$0xf]
    %v268 = vld [vmem:[#allocation4 + $0xd8] sm:$0xff]
    %v269 = vld [vmem:[#allocation4 + $0xe0] sm:$0xf]
    %v270 = vld [vmem:[#allocation4 + $0xe4] sm:$0xff]
    %v271 = vld [vmem:[#allocation4 + $0xec] sm:$0xf]
    %v272 = vld [vmem:[#allocation4 + $0xf0] sm:$0xff]
    %v273 = vld [vmem:[#allocation4 + $0xf8] sm:$0xf]
    %v274 = vld [vmem:[#allocation4 + $0xfc] sm:$0xff]
    %v275 = vld [vmem:[#allocation4 + $0x104] sm:$0xf]
    %v276 = vld [vmem:[#allocation4 + $0x108] sm:$0xff]
    %v277 = vld [vmem:[#allocation4 + $0x110] sm:$0xf]
    %v278 = vld [vmem:[#allocation4 + $0x114] sm:$0xff]
    %v279 = vld [vmem:[#allocation4 + $0x11c] sm:$0xf]
    %v280 = vld [vmem:[#allocation4 + $0x120] sm:$0xff]
    %v281 = vld [vmem:[#allocation4 + $0x128] sm:$0xf]
    %v282 = vld [vmem:[#allocation4 + $0x12c] sm:$0xff]
    %v283 = vld [vmem:[#allocation4 + $0x134] sm:$0xf]
    %v284 = vld [vmem:[#allocation4 + $0x138] sm:$0xff]
    %v285 = vld [vmem:[#allocation4 + $0x140] sm:$0xf]
    %v286 = vld [vmem:[#allocation4 + $0x144] sm:$0xff]
    %v287 = vld [vmem:[#allocation4 + $0x14c] sm:$0xf]
    %v288 = vld [vmem:[#allocation4 + $0x150] sm:$0xff]
    %v289 = vld [vmem:[#allocation4 + $0x158] sm:$0xf]
    %v290 = vld [vmem:[#allocation4 + $0x15c] sm:$0xff]
    %v291 = vld [vmem:[#allocation4 + $0x164] sm:$0xf]
    %v292 = vld [vmem:[#allocation4 + $0x168] sm:$0xff]
    %v293 = vld [vmem:[#allocation4 + $0x170] sm:$0xf]
    %v294 = vld [vmem:[#allocation4 + $0x174] sm:$0xff]
    %v295 = vld [vmem:[#allocation4 + $0x17c] sm:$0xf]
    %v296 = vld [vmem:[#allocation4 + $0x180] sm:$0xff]
    %v297 = vld [vmem:[#allocation4 + $0x188] sm:$0xf]
    %v298 = vld [vmem:[#allocation4 + $0x18c] sm:$0xff]
    %v299 = vld [vmem:[#allocation4 + $0x194] sm:$0xf]
    %v300 = vld [vmem:[#allocation4 + $0x198] sm:$0xff]
    %v301 = vld [vmem:[#allocation4 + $0x1a0] sm:$0xf]
    %v302 = vld [vmem:[#allocation4 + $0x1a4] sm:$0xff]
    %v303 = vld [vmem:[#allocation4 + $0x1ac] sm:$0xf]
    %v304 = vld [vmem:[#allocation4 + $0x1b0] sm:$0xff]
    %v305 = vld [vmem:[#allocation4 + $0x1b8] sm:$0xf]
    %v306 = vld [vmem:[#allocation4 + $0x1bc] sm:$0xff]
    %v307 = vld [vmem:[#allocation4 + $0x1c4] sm:$0xf]
    %v308 = vld [vmem:[#allocation4 + $0x1c8] sm:$0xff]
    %v309 = vld [vmem:[#allocation4 + $0x1d0] sm:$0xf]
    %v310 = vld [vmem:[#allocation4 + $0x1d4] sm:$0xff]
    %v311 = vld [vmem:[#allocation4 + $0x1dc] sm:$0xf]
    %v312 = vld [vmem:[#allocation4 + $0x1e0] sm:$0xff]
    %v313 = vld [vmem:[#allocation4 + $0x1e8] sm:$0xf]
    %v314 = vld [vmem:[#allocation4 + $0x1ec] sm:$0xff]
    %v315 = vld [vmem:[#allocation4 + $0x1f4] sm:$0xf]
    %v316 = vld [vmem:[#allocation4 + $0x1f8] sm:$0xff]
    %v317 = vld [vmem:[#allocation4 + $0x200] sm:$0xf]
    %v318 = vld [vmem:[#allocation4 + $0x204] sm:$0xff]
    %v319 = vld [vmem:[#allocation4 + $0x20c] sm:$0xf]
    %v320 = vld [vmem:[#allocation4 + $0x210] sm:$0xff]
    %v321 = vld [vmem:[#allocation4 + $0x218] sm:$0xf]
    %v322 = vld [vmem:[#allocation4 + $0x21c] sm:$0xff]
    %v323 = vld [vmem:[#allocation4 + $0x224] sm:$0xf]
    %v324 = vld [vmem:[#allocation4 + $0x228] sm:$0xff]
    %v325 = vld [vmem:[#allocation4 + $0x230] sm:$0xf]
    %v326 = vld [vmem:[#allocation4 + $0x234] sm:$0xff]
    %v327 = vld [vmem:[#allocation4 + $0x23c] sm:$0xf]
    %v328 = vld [vmem:[#allocation4 + $0x240] sm:$0xff]
    %v329 = vld [vmem:[#allocation4 + $0x248] sm:$0xf]
    %v330 = vld [vmem:[#allocation4 + $0x24c] sm:$0xff]
    %v331 = vld [vmem:[#allocation4 + $0x254] sm:$0xf]
    %v432 = vunpack.c.l.b16 %v232
    %v433 = vunpack.c.h.b16 %v232
    %v434 = vunpack.c.l.b16 %v233
    %v435 = vunpack.c.l.b16 %v234
    %v436 = vunpack.c.h.b16 %v234
    %v437 = vunpack.c.l.b16 %v235
    %v438 = vunpack.c.l.b16 %v236
    %v439 = vunpack.c.h.b16 %v236
    %v440 = vunpack.c.l.b16 %v237
    %v441 = vunpack.c.l.b16 %v238
    %v442 = vunpack.c.h.b16 %v238
    %v443 = vunpack.c.l.b16 %v239
    %v444 = vunpack.c.l.b16 %v240
    %v445 = vunpack.c.h.b16 %v240
    %v446 = vunpack.c.l.b16 %v241
    %v447 = vunpack.c.l.b16 %v242
    %v448 = vunpack.c.h.b16 %v242
    %v449 = vunpack.c.l.b16 %v243
    %v450 = vunpack.c.l.b16 %v244
    %v451 = vunpack.c.h.b16 %v244
    %v452 = vunpack.c.l.b16 %v245
    %v453 = vunpack.c.l.b16 %v246
    %v454 = vunpack.c.h.b16 %v246
    %v455 = vunpack.c.l.b16 %v247
    %v456 = vunpack.c.l.b16 %v248
    %v457 = vunpack.c.h.b16 %v248
    %v458 = vunpack.c.l.b16 %v249
    %v459 = vunpack.c.l.b16 %v250
    %v460 = vunpack.c.h.b16 %v250
    %v461 = vunpack.c.l.b16 %v251
    %v462 = vunpack.c.l.b16 %v252
    %v463 = vunpack.c.h.b16 %v252
    %v464 = vunpack.c.l.b16 %v253
    %v465 = vunpack.c.l.b16 %v254
    %v466 = vunpack.c.h.b16 %v254
    %v467 = vunpack.c.l.b16 %v255
    %v468 = vunpack.c.l.b16 %v256
    %v469 = vunpack.c.h.b16 %v256
    %v470 = vunpack.c.l.b16 %v257
    %v471 = vunpack.c.l.b16 %v258
    %v472 = vunpack.c.h.b16 %v258
    %v473 = vunpack.c.l.b16 %v259
    %v474 = vunpack.c.l.b16 %v260
    %v475 = vunpack.c.h.b16 %v260
    %v476 = vunpack.c.l.b16 %v261
    %v477 = vunpack.c.l.b16 %v262
    %v478 = vunpack.c.h.b16 %v262
    %v479 = vunpack.c.l.b16 %v263
    %v480 = vunpack.c.l.b16 %v264
    %v481 = vunpack.c.h.b16 %v264
    %v482 = vunpack.c.l.b16 %v265
    %v483 = vunpack.c.l.b16 %v266
    %v484 = vunpack.c.h.b16 %v266
    %v485 = vunpack.c.l.b16 %v267
    %v486 = vunpack.c.l.b16 %v268
    %v487 = vunpack.c.h.b16 %v268
    %v488 = vunpack.c.l.b16 %v269
    %v489 = vunpack.c.l.b16 %v270
    %v490 = vunpack.c.h.b16 %v270
    %v491 = vunpack.c.l.b16 %v271
    %v492 = vunpack.c.l.b16 %v272
    %v493 = vunpack.c.h.b16 %v272
    %v494 = vunpack.c.l.b16 %v273
    %v495 = vunpack.c.l.b16 %v274
    %v496 = vunpack.c.h.b16 %v274
    %v497 = vunpack.c.l.b16 %v275
    %v498 = vunpack.c.l.b16 %v276
    %v499 = vunpack.c.h.b16 %v276
    %v500 = vunpack.c.l.b16 %v277
    %v501 = vunpack.c.l.b16 %v278
    %v502 = vunpack.c.h.b16 %v278
    %v503 = vunpack.c.l.b16 %v279
    %v504 = vunpack.c.l.b16 %v280
    %v505 = vunpack.c.h.b16 %v280
    %v506 = vunpack.c.l.b16 %v281
    %v507 = vunpack.c.l.b16 %v282
    %v508 = vunpack.c.h.b16 %v282
    %v509 = vunpack.c.l.b16 %v283
    %v510 = vunpack.c.l.b16 %v284
    %v511 = vunpack.c.h.b16 %v284
    %v512 = vunpack.c.l.b16 %v285
    %v513 = vunpack.c.l.b16 %v286
    %v514 = vunpack.c.h.b16 %v286
    %v515 = vunpack.c.l.b16 %v287
    %v516 = vunpack.c.l.b16 %v288
    %v517 = vunpack.c.h.b16 %v288
    %v518 = vunpack.c.l.b16 %v289
    %v519 = vunpack.c.l.b16 %v290
    %v520 = vunpack.c.h.b16 %v290
    %v521 = vunpack.c.l.b16 %v291
    %v522 = vunpack.c.l.b16 %v292
    %v523 = vunpack.c.h.b16 %v292
    %v524 = vunpack.c.l.b16 %v293
    %v525 = vunpack.c.l.b16 %v294
    %v526 = vunpack.c.h.b16 %v294
    %v527 = vunpack.c.l.b16 %v295
    %v528 = vunpack.c.l.b16 %v296
    %v529 = vunpack.c.h.b16 %v296
    %v530 = vunpack.c.l.b16 %v297
    %v531 = vunpack.c.l.b16 %v298
    %v532 = vunpack.c.h.b16 %v298
    %v533 = vunpack.c.l.b16 %v299
    %v534 = vunpack.c.l.b16 %v300
    %v535 = vunpack.c.h.b16 %v300
    %v536 = vunpack.c.l.b16 %v301
    %v537 = vunpack.c.l.b16 %v302
    %v538 = vunpack.c.h.b16 %v302
    %v539 = vunpack.c.l.b16 %v303
    %v540 = vunpack.c.l.b16 %v304
    %v541 = vunpack.c.h.b16 %v304
    %v542 = vunpack.c.l.b16 %v305
    %v543 = vunpack.c.l.b16 %v306
    %v544 = vunpack.c.h.b16 %v306
    %v545 = vunpack.c.l.b16 %v307
    %v546 = vunpack.c.l.b16 %v308
    %v547 = vunpack.c.h.b16 %v308
    %v548 = vunpack.c.l.b16 %v309
    %v549 = vunpack.c.l.b16 %v310
    %v550 = vunpack.c.h.b16 %v310
    %v551 = vunpack.c.l.b16 %v311
    %v552 = vunpack.c.l.b16 %v312
    %v553 = vunpack.c.h.b16 %v312
    %v554 = vunpack.c.l.b16 %v313
    %v555 = vunpack.c.l.b16 %v314
    %v556 = vunpack.c.h.b16 %v314
    %v557 = vunpack.c.l.b16 %v315
    %v558 = vunpack.c.l.b16 %v316
    %v559 = vunpack.c.h.b16 %v316
    %v560 = vunpack.c.l.b16 %v317
    %v561 = vunpack.c.l.b16 %v318
    %v562 = vunpack.c.h.b16 %v318
    %v563 = vunpack.c.l.b16 %v319
    %v564 = vunpack.c.l.b16 %v320
    %v565 = vunpack.c.h.b16 %v320
    %v566 = vunpack.c.l.b16 %v321
    %v567 = vunpack.c.l.b16 %v322
    %v568 = vunpack.c.h.b16 %v322
    %v569 = vunpack.c.l.b16 %v323
    %v570 = vunpack.c.l.b16 %v324
    %v571 = vunpack.c.h.b16 %v324
    %v572 = vunpack.c.l.b16 %v325
    %v573 = vunpack.c.l.b16 %v326
    %v574 = vunpack.c.h.b16 %v326
    %v575 = vunpack.c.l.b16 %v327
    %v576 = vunpack.c.l.b16 %v328
    %v577 = vunpack.c.h.b16 %v328
    %v578 = vunpack.c.l.b16 %v329
    %v579 = vunpack.c.l.b16 %v330
    %v580 = vunpack.c.h.b16 %v330
    %v581 = vunpack.c.l.b16 %v331
    %v582 = vpack.c.b16 %v435, %v432
    %v583 = vpack.c.b16 %v436, %v433
    %v584 = vpack.c.b16 %v437, %v434
    %v585 = vpack.c.b16 %v441, %v438
    %v586 = vpack.c.b16 %v442, %v439
    %v587 = vpack.c.b16 %v443, %v440
    %v588 = vpack.c.b16 %v447, %v444
    %v589 = vpack.c.b16 %v448, %v445
    %v590 = vpack.c.b16 %v449, %v446
    %v591 = vpack.c.b16 %v453, %v450
    %v592 = vpack.c.b16 %v454, %v451
    %v593 = vpack.c.b16 %v455, %v452
    %v594 = vpack.c.b16 %v459, %v456
    %v595 = vpack.c.b16 %v460, %v457
    %v596 = vpack.c.b16 %v461, %v458
    %v597 = vpack.c.b16 %v465, %v462
    %v598 = vpack.c.b16 %v466, %v463
    %v599 = vpack.c.b16 %v467, %v464
    %v600 = vpack.c.b16 %v471, %v468
    %v601 = vpack.c.b16 %v472, %v469
    %v602 = vpack.c.b16 %v473, %v470
    %v603 = vpack.c.b16 %v477, %v474
    %v604 = vpack.c.b16 %v478, %v475
    %v605 = vpack.c.b16 %v479, %v476
    %v606 = vpack.c.b16 %v483, %v480
    %v607 = vpack.c.b16 %v484, %v481
    %v608 = vpack.c.b16 %v485, %v482
    %v609 = vpack.c.b16 %v489, %v486
    %v610 = vpack.c.b16 %v490, %v487
    %v611 = vpack.c.b16 %v491, %v488
    %v612 = vpack.c.b16 %v495, %v492
    %v613 = vpack.c.b16 %v496, %v493
    %v614 = vpack.c.b16 %v497, %v494
    %v615 = vpack.c.b16 %v501, %v498
    %v616 = vpack.c.b16 %v502, %v499
    %v617 = vpack.c.b16 %v503, %v500
    %v618 = vpack.c.b16 %v507, %v504
    %v619 = vpack.c.b16 %v508, %v505
    %v620 = vpack.c.b16 %v509, %v506
    %v621 = vpack.c.b16 %v513, %v510
    %v622 = vpack.c.b16 %v514, %v511
    %v623 = vpack.c.b16 %v515, %v512
    %v624 = vpack.c.b16 %v519, %v516
    %v625 = vpack.c.b16 %v520, %v517
    %v626 = vpack.c.b16 %v521, %v518
    %v627 = vpack.c.b16 %v525, %v522
    %v628 = vpack.c.b16 %v526, %v523
    %v629 = vpack.c.b16 %v527, %v524
    %v630 = vpack.c.b16 %v531, %v528
    %v631 = vpack.c.b16 %v532, %v529
    %v632 = vpack.c.b16 %v533, %v530
    %v633 = vpack.c.b16 %v537, %v534
    %v634 = vpack.c.b16 %v538, %v535
    %v635 = vpack.c.b16 %v539, %v536
    %v636 = vpack.c.b16 %v543, %v540
    %v637 = vpack.c.b16 %v544, %v541
    %v638 = vpack.c.b16 %v545, %v542
    %v639 = vpack.c.b16 %v549, %v546
    %v640 = vpack.c.b16 %v550, %v547
    %v641 = vpack.c.b16 %v551, %v548
    %v642 = vpack.c.b16 %v555, %v552
    %v643 = vpack.c.b16 %v556, %v553
    %v644 = vpack.c.b16 %v557, %v554
    %v645 = vpack.c.b16 %v561, %v558
    %v646 = vpack.c.b16 %v562, %v559
    %v647 = vpack.c.b16 %v563, %v560
    %v648 = vpack.c.b16 %v567, %v564
    %v649 = vpack.c.b16 %v568, %v565
    %v650 = vpack.c.b16 %v569, %v566
    %v651 = vpack.c.b16 %v573, %v570
    %v652 = vpack.c.b16 %v574, %v571
    %v653 = vpack.c.b16 %v575, %v572
    %v654 = vpack.c.b16 %v579, %v576
    %v655 = vpack.c.b16 %v580, %v577
    %v656 = vpack.c.b16 %v581, %v578
    %vm732 = vcmask 130048
    %v734 = vsel %vm732, %v230, 0
    %736 = vmatpush.bf16.msra.mxu0 %v603
    %737 = vmatpush.bf16.msra.mxu0 %v600
    %738 = vmatpush.bf16.msra.mxu0 %v597
    %739 = vmatpush.bf16.msra.mxu0 %v594
    %740 = vmatpush.bf16.msra.mxu0 %v591
    %741 = vmatpush.bf16.msra.mxu0 %v588
    %742 = vmatpush.bf16.msra.mxu0 %v585
    %743 = vmatpush.bf16.msra.mxu0 %v582
    %744 = vmatmul.bf16.gmra.mxu0 %v227
    %v745 = vpop.f32.mrf.mxu0
    %v746 = vadd.f32 0.0, %v745
    %v747 = vpop.f32.mrf.mxu0
    %v748 = vadd.f32 0.0, %v747
    %749 = vdwg.mxu0
    %750 = vmatpush.bf16.msra.mxu0 %v627
    %751 = vmatpush.bf16.msra.mxu0 %v624
    %752 = vmatpush.bf16.msra.mxu0 %v621
    %753 = vmatpush.bf16.msra.mxu0 %v618
    %754 = vmatpush.bf16.msra.mxu0 %v615
    %755 = vmatpush.bf16.msra.mxu0 %v612
    %756 = vmatpush.bf16.msra.mxu0 %v609
    %757 = vmatpush.bf16.msra.mxu0 %v606
    %758 = vmatmul.bf16.gmra.mxu0 %v228
    %v759 = vpop.f32.mrf.mxu0
    %v760 = vadd.f32 %v746, %v759
    %v761 = vpop.f32.mrf.mxu0
    %v762 = vadd.f32 %v748, %v761
    %763 = vdwg.mxu0
    %764 = vmatpush.bf16.msra.mxu0 %v651
    %765 = vmatpush.bf16.msra.mxu0 %v648
    %766 = vmatpush.bf16.msra.mxu0 %v645
    %767 = vmatpush.bf16.msra.mxu0 %v642
    %768 = vmatpush.bf16.msra.mxu0 %v639
    %769 = vmatpush.bf16.msra.mxu0 %v636
    %770 = vmatpush.bf16.msra.mxu0 %v633
    %771 = vmatpush.bf16.msra.mxu0 %v630
    %772 = vmatmul.bf16.gmra.mxu0 %v229
    %v773 = vpop.f32.mrf.mxu0
    %v774 = vadd.f32 %v760, %v773
    %v775 = vpop.f32.mrf.mxu0
    %v776 = vadd.f32 %v762, %v775
    %777 = vdwg.mxu0
    %778 = vmatpush.bf16.msra.mxu0 0
    %779 = vmatpush.bf16.msra.mxu0 0
    %780 = vmatpush.bf16.msra.mxu0 0
    %781 = vmatpush.bf16.msra.mxu0 0
    %782 = vmatpush.bf16.msra.mxu0 0
    %783 = vmatpush.bf16.msra.mxu0 0
    %784 = vmatpush.bf16.msra.mxu0 0
    %785 = vmatpush.bf16.msra.mxu0 %v654
    %786 = vmatmul.bf16.gmra.mxu0 %v734
    %v787 = vpop.f32.mrf.mxu0
    %v788 = vadd.f32 %v774, %v787
    %v789 = vpop.f32.mrf.mxu0
    %v790 = vadd.f32 %v776, %v789
    %791 = vdwg.mxu0
    %792 = vmatpush.bf16.msra.mxu0 %v604
    %793 = vmatpush.bf16.msra.mxu0 %v601
    %794 = vmatpush.bf16.msra.mxu0 %v598
    %795 = vmatpush.bf16.msra.mxu0 %v595
    %796 = vmatpush.bf16.msra.mxu0 %v592
    %797 = vmatpush.bf16.msra.mxu0 %v589
    %798 = vmatpush.bf16.msra.mxu0 %v586
    %799 = vmatpush.bf16.msra.mxu0 %v583
    %800 = vmatmul.bf16.gmra.mxu0 %v227
    %v801 = vpop.f32.mrf.mxu0
    %v802 = vadd.f32 0.0, %v801
    %v803 = vpop.f32.mrf.mxu0
    %v804 = vadd.f32 0.0, %v803
    %805 = vdwg.mxu0
    %806 = vmatpush.bf16.msra.mxu0 %v628
    %807 = vmatpush.bf16.msra.mxu0 %v625
    %808 = vmatpush.bf16.msra.mxu0 %v622
    %809 = vmatpush.bf16.msra.mxu0 %v619
    %810 = vmatpush.bf16.msra.mxu0 %v616
    %811 = vmatpush.bf16.msra.mxu0 %v613
    %812 = vmatpush.bf16.msra.mxu0 %v610
    %813 = vmatpush.bf16.msra.mxu0 %v607
    %814 = vmatmul.bf16.gmra.mxu0 %v228
    %v815 = vpop.f32.mrf.mxu0
    %v816 = vadd.f32 %v802, %v815
    %v817 = vpop.f32.mrf.mxu0
    %v818 = vadd.f32 %v804, %v817
    %819 = vdwg.mxu0
    %820 = vmatpush.bf16.msra.mxu0 %v652
    %821 = vmatpush.bf16.msra.mxu0 %v649
    %822 = vmatpush.bf16.msra.mxu0 %v646
    %823 = vmatpush.bf16.msra.mxu0 %v643
    %824 = vmatpush.bf16.msra.mxu0 %v640
    %825 = vmatpush.bf16.msra.mxu0 %v637
    %826 = vmatpush.bf16.msra.mxu0 %v634
    %827 = vmatpush.bf16.msra.mxu0 %v631
    %828 = vmatmul.bf16.gmra.mxu0 %v229
    %v829 = vpop.f32.mrf.mxu0
    %v830 = vadd.f32 %v816, %v829
    %v831 = vpop.f32.mrf.mxu0
    %v832 = vadd.f32 %v818, %v831
    %833 = vdwg.mxu0
    %834 = vmatpush.bf16.msra.mxu0 0
    %835 = vmatpush.bf16.msra.mxu0 0
    %836 = vmatpush.bf16.msra.mxu0 0
    %837 = vmatpush.bf16.msra.mxu0 0
    %838 = vmatpush.bf16.msra.mxu0 0
    %839 = vmatpush.bf16.msra.mxu0 0
    %840 = vmatpush.bf16.msra.mxu0 0
    %841 = vmatpush.bf16.msra.mxu0 %v655
    %842 = vmatmul.bf16.gmra.mxu0 %v734
    %v843 = vpop.f32.mrf.mxu0
    %v844 = vadd.f32 %v830, %v843
    %v845 = vpop.f32.mrf.mxu0
    %v846 = vadd.f32 %v832, %v845
    %847 = vdwg.mxu0
    %848 = vmatpush.bf16.msra.mxu0 %v605
    %849 = vmatpush.bf16.msra.mxu0 %v602
    %850 = vmatpush.bf16.msra.mxu0 %v599
    %851 = vmatpush.bf16.msra.mxu0 %v596
    %852 = vmatpush.bf16.msra.mxu0 %v593
    %853 = vmatpush.bf16.msra.mxu0 %v590
    %854 = vmatpush.bf16.msra.mxu0 %v587
    %855 = vmatpush.bf16.msra.mxu0 %v584
    %856 = vmatmul.bf16.gmra.mxu0 %v227
    %v857 = vpop.f32.mrf.mxu0
    %v858 = vadd.f32 0.0, %v857
    %v859 = vpop.f32.mrf.mxu0
    %v860 = vadd.f32 0.0, %v859
    %861 = vdwg.mxu0
    %862 = vmatpush.bf16.msra.mxu0 %v629
    %863 = vmatpush.bf16.msra.mxu0 %v626
    %864 = vmatpush.bf16.msra.mxu0 %v623
    %865 = vmatpush.bf16.msra.mxu0 %v620
    %866 = vmatpush.bf16.msra.mxu0 %v617
    %867 = vmatpush.bf16.msra.mxu0 %v614
    %868 = vmatpush.bf16.msra.mxu0 %v611
    %869 = vmatpush.bf16.msra.mxu0 %v608
    %870 = vmatmul.bf16.gmra.mxu0 %v228
    %v871 = vpop.f32.mrf.mxu0
    %v872 = vadd.f32 %v858, %v871
    %v873 = vpop.f32.mrf.mxu0
    %v874 = vadd.f32 %v860, %v873
    %875 = vdwg.mxu0
    %876 = vmatpush.bf16.msra.mxu0 %v653
    %877 = vmatpush.bf16.msra.mxu0 %v650
    %878 = vmatpush.bf16.msra.mxu0 %v647
    %879 = vmatpush.bf16.msra.mxu0 %v644
    %880 = vmatpush.bf16.msra.mxu0 %v641
    %881 = vmatpush.bf16.msra.mxu0 %v638
    %882 = vmatpush.bf16.msra.mxu0 %v635
    %883 = vmatpush.bf16.msra.mxu0 %v632
    %884 = vmatmul.bf16.gmra.mxu0 %v229
    %v885 = vpop.f32.mrf.mxu0
    %v886 = vadd.f32 %v872, %v885
    %v887 = vpop.f32.mrf.mxu0
    %v888 = vadd.f32 %v874, %v887
    %889 = vdwg.mxu0
    %890 = vmatpush.bf16.msra.mxu0 0
    %891 = vmatpush.bf16.msra.mxu0 0
    %892 = vmatpush.bf16.msra.mxu0 0
    %893 = vmatpush.bf16.msra.mxu0 0
    %894 = vmatpush.bf16.msra.mxu0 0
    %895 = vmatpush.bf16.msra.mxu0 0
    %896 = vmatpush.bf16.msra.mxu0 0
    %897 = vmatpush.bf16.msra.mxu0 %v656
    %898 = vmatmul.bf16.gmra.mxu0 %v734
    %v899 = vpop.f32.mrf.mxu0
    %v900 = vadd.f32 %v886, %v899
    %v901 = vpop.f32.mrf.mxu0
    %v902 = vadd.f32 %v888, %v901
    %903 = vdwg.mxu0
    %v905 = vperm.slane %v231, 0
    %v906 = vperm.slane %v231, 1
    %v907 = vperm.slane %v231, 2
    %v911 = vadd.f32 %v905, %v788
    %v912 = vadd.f32 %v906, %v844
    %v913 = vadd.f32 %v907, %v900
    %v914 = vadd.f32 %v905, %v790
    %v915 = vadd.f32 %v906, %v846
    %v916 = vadd.f32 %v907, %v902
    %v917 = vpack.c.bf16 %v912, %v911
    %v918 = vpack.c.bf16 %v913, %v913
    %v919 = vpack.c.bf16 %v915, %v914
    %v920 = vpack.c.bf16 %v916, %v916
    %v921 = vunpack.c.l.bf16 %v917
    %v922 = vunpack.c.h.bf16 %v917
    %v923 = vunpack.c.l.bf16 %v918
    %v924 = vunpack.c.l.bf16 %v919
    %v925 = vunpack.c.h.bf16 %v919
    %v926 = vunpack.c.l.bf16 %v920
    %v927 = vmax.f32 %v921, 0.0
    %v928 = vmax.f32 %v922, 0.0
    %v929 = vmax.f32 %v923, 0.0
    %v930 = vmax.f32 %v924, 0.0
    %v931 = vmax.f32 %v925, 0.0
    %v932 = vmax.f32 %v926, 0.0
    %v933 = vpack.c.bf16 %v930, %v927
    %v934 = vpack.c.bf16 %v931, %v928
    %v935 = vpack.c.bf16 %v932, %v929
    %v936 = vld [vmem:[%s6] sm:$0x1]
    %v937 = vld [vmem:[#allocation6] sm:$0xf]
    %v938 = vld [vmem:[#allocation6 + $0x4] sm:$0xf]
    %v939 = vld [vmem:[#allocation6 + $0x8] sm:$0xf]
    %v940 = vld [vmem:[#allocation6 + $0xc] sm:$0xf]
    %v941 = vld [vmem:[#allocation6 + $0x10] sm:$0xf]
    %v942 = vld [vmem:[#allocation6 + $0x14] sm:$0xf]
    %v943 = vld [vmem:[#allocation6 + $0x18] sm:$0xf]
    %v944 = vld [vmem:[#allocation6 + $0x1c] sm:$0xf]
    %v945 = vld [vmem:[#allocation6 + $0x20] sm:$0xf]
    %v946 = vld [vmem:[#allocation6 + $0x24] sm:$0xf]
    %v947 = vld [vmem:[#allocation6 + $0x28] sm:$0xf]
    %v948 = vld [vmem:[#allocation6 + $0x2c] sm:$0xf]
    %v949 = vld [vmem:[#allocation6 + $0x30] sm:$0xf]
    %v950 = vld [vmem:[#allocation6 + $0x34] sm:$0xf]
    %v951 = vld [vmem:[#allocation6 + $0x38] sm:$0xf]
    %v952 = vld [vmem:[#allocation6 + $0x3c] sm:$0xf]
    %v953 = vld [vmem:[#allocation6 + $0x40] sm:$0xf]
    %v954 = vld [vmem:[#allocation6 + $0x44] sm:$0xf]
    %v955 = vld [vmem:[#allocation6 + $0x48] sm:$0xf]
    %v956 = vld [vmem:[#allocation6 + $0x4c] sm:$0xf]
    %v957 = vld [vmem:[#allocation6 + $0x50] sm:$0xf]
    %v958 = vld [vmem:[#allocation6 + $0x54] sm:$0xf]
    %v959 = vld [vmem:[#allocation6 + $0x58] sm:$0xf]
    %v960 = vld [vmem:[#allocation6 + $0x5c] sm:$0xf]
    %v961 = vld [vmem:[#allocation6 + $0x60] sm:$0xf]
    %v962 = vld [vmem:[#allocation6 + $0x64] sm:$0xf]
    %v963 = vld [vmem:[#allocation6 + $0x68] sm:$0xf]
    %v964 = vld [vmem:[#allocation6 + $0x6c] sm:$0xf]
    %v965 = vld [vmem:[#allocation6 + $0x70] sm:$0xf]
    %v966 = vld [vmem:[#allocation6 + $0x74] sm:$0xf]
    %v967 = vld [vmem:[#allocation6 + $0x78] sm:$0xf]
    %v968 = vld [vmem:[#allocation6 + $0x7c] sm:$0xf]
    %v969 = vld [vmem:[#allocation6 + $0x80] sm:$0xf]
    %v970 = vld [vmem:[#allocation6 + $0x84] sm:$0xf]
    %v971 = vld [vmem:[#allocation6 + $0x88] sm:$0xf]
    %v972 = vld [vmem:[#allocation6 + $0x8c] sm:$0xf]
    %v973 = vld [vmem:[#allocation6 + $0x90] sm:$0xf]
    %v974 = vld [vmem:[#allocation6 + $0x94] sm:$0xf]
    %v1013 = vunpack.c.l.b16 %v937
    %v1014 = vunpack.c.l.b16 %v938
    %v1015 = vunpack.c.l.b16 %v939
    %v1016 = vunpack.c.l.b16 %v940
    %v1017 = vunpack.c.l.b16 %v941
    %v1018 = vunpack.c.l.b16 %v942
    %v1019 = vunpack.c.l.b16 %v943
    %v1020 = vunpack.c.l.b16 %v944
    %v1021 = vunpack.c.l.b16 %v945
    %v1022 = vunpack.c.l.b16 %v946
    %v1023 = vunpack.c.l.b16 %v947
    %v1024 = vunpack.c.l.b16 %v948
    %v1025 = vunpack.c.l.b16 %v949
    %v1026 = vunpack.c.l.b16 %v950
    %v1027 = vunpack.c.l.b16 %v951
    %v1028 = vunpack.c.l.b16 %v952
    %v1029 = vunpack.c.l.b16 %v953
    %v1030 = vunpack.c.l.b16 %v954
    %v1031 = vunpack.c.l.b16 %v955
    %v1032 = vunpack.c.l.b16 %v956
    %v1033 = vunpack.c.l.b16 %v957
    %v1034 = vunpack.c.l.b16 %v958
    %v1035 = vunpack.c.l.b16 %v959
    %v1036 = vunpack.c.l.b16 %v960
    %v1037 = vunpack.c.l.b16 %v961
    %v1038 = vunpack.c.l.b16 %v962
    %v1039 = vunpack.c.l.b16 %v963
    %v1040 = vunpack.c.l.b16 %v964
    %v1041 = vunpack.c.l.b16 %v965
    %v1042 = vunpack.c.l.b16 %v966
    %v1043 = vunpack.c.l.b16 %v967
    %v1044 = vunpack.c.l.b16 %v968
    %v1045 = vunpack.c.l.b16 %v969
    %v1046 = vunpack.c.l.b16 %v970
    %v1047 = vunpack.c.l.b16 %v971
    %v1048 = vunpack.c.l.b16 %v972
    %v1049 = vunpack.c.l.b16 %v973
    %v1050 = vunpack.c.l.b16 %v974
    %v1051 = vpack.c.b16 %v1014, %v1013
    %v1052 = vpack.c.b16 %v1016, %v1015
    %v1053 = vpack.c.b16 %v1018, %v1017
    %v1054 = vpack.c.b16 %v1020, %v1019
    %v1055 = vpack.c.b16 %v1022, %v1021
    %v1056 = vpack.c.b16 %v1024, %v1023
    %v1057 = vpack.c.b16 %v1026, %v1025
    %v1058 = vpack.c.b16 %v1028, %v1027
    %v1059 = vpack.c.b16 %v1030, %v1029
    %v1060 = vpack.c.b16 %v1032, %v1031
    %v1061 = vpack.c.b16 %v1034, %v1033
    %v1062 = vpack.c.b16 %v1036, %v1035
    %v1063 = vpack.c.b16 %v1038, %v1037
    %v1064 = vpack.c.b16 %v1040, %v1039
    %v1065 = vpack.c.b16 %v1042, %v1041
    %v1066 = vpack.c.b16 %v1044, %v1043
    %v1067 = vpack.c.b16 %v1046, %v1045
    %v1068 = vpack.c.b16 %v1048, %v1047
    %v1069 = vpack.c.b16 %v1050, %v1049
    %vm1089 = vcmask 392192
    %v1091 = vsel %vm1089, %v935, 0
    %1093 = vmatpush.bf16.msra.mxu0 %v1058
    %1094 = vmatpush.bf16.msra.mxu0 %v1057
    %1095 = vmatpush.bf16.msra.mxu0 %v1056
    %1096 = vmatpush.bf16.msra.mxu0 %v1055
    %1097 = vmatpush.bf16.msra.mxu0 %v1054
    %1098 = vmatpush.bf16.msra.mxu0 %v1053
    %1099 = vmatpush.bf16.msra.mxu0 %v1052
    %1100 = vmatpush.bf16.msra.mxu0 %v1051
    %1101 = vmatmul.bf16.gmra.mxu0 %v933
    %v1102 = vpop.f32.mrf.mxu0
    %v1103 = vadd.f32 0.0, %v1102
    %v1104 = vpop.f32.mrf.mxu0
    %v1105 = vadd.f32 0.0, %v1104
    %1106 = vdwg.mxu0
    %1107 = vmatpush.bf16.msra.mxu0 %v1066
    %1108 = vmatpush.bf16.msra.mxu0 %v1065
    %1109 = vmatpush.bf16.msra.mxu0 %v1064
    %1110 = vmatpush.bf16.msra.mxu0 %v1063
    %1111 = vmatpush.bf16.msra.mxu0 %v1062
    %1112 = vmatpush.bf16.msra.mxu0 %v1061
    %1113 = vmatpush.bf16.msra.mxu0 %v1060
    %1114 = vmatpush.bf16.msra.mxu0 %v1059
    %1115 = vmatmul.bf16.gmra.mxu0 %v934
    %v1116 = vpop.f32.mrf.mxu0
    %v1117 = vadd.f32 %v1103, %v1116
    %v1118 = vpop.f32.mrf.mxu0
    %v1119 = vadd.f32 %v1105, %v1118
    %1120 = vdwg.mxu0
    %1121 = vmatpush.bf16.msra.mxu0 0
    %1122 = vmatpush.bf16.msra.mxu0 0
    %1123 = vmatpush.bf16.msra.mxu0 0
    %1124 = vmatpush.bf16.msra.mxu0 0
    %1125 = vmatpush.bf16.msra.mxu0 0
    %1126 = vmatpush.bf16.msra.mxu0 %v1069
    %1127 = vmatpush.bf16.msra.mxu0 %v1068
    %1128 = vmatpush.bf16.msra.mxu0 %v1067
    %1129 = vmatmul.bf16.gmra.mxu0 %v1091
    %v1130 = vpop.f32.mrf.mxu0
    %v1131 = vadd.f32 %v1117, %v1130
    %v1132 = vpop.f32.mrf.mxu0
    %v1133 = vadd.f32 %v1119, %v1132
    %1134 = vdwg.mxu0
    %v1136 = vperm.slane %v936, 0
    %v1138 = vadd.f32 %v1136, %v1131
    %v1139 = vadd.f32 %v1136, %v1133
    %1140 = vst [vmem:[%s7] sm:$0xff] %v1138
    %1141 = vst [vmem:[%s7 + $0x8] sm:$0xff] %v1139
    // Predicated region
    $region42: #{net_forward.1} parent=1 // pred_check
      _
    $region43: #{net_forward.1} parent=1 // pred_check_branch
      %1143 = sbr.rel (0) target = $region45
    $region44: #{net_forward.1} parent=1 // pred_region
      _
    $region45: #{net_forward.1} parent=1 // pred_fallthru
      _
    // Predicated region
    $region46: #{net_forward.1} parent=1 // pred_check
      _
    $region47: #{net_forward.1} parent=1 // pred_check_branch
      %1145 = sbr.rel (0) target = $region49
    $region48: #{net_forward.1} parent=1 // pred_region
      _
    $region49: #{net_forward.1} parent=1 // pred_fallthru
      _
    %1146 = vsyncpa [#allocation3], 1
    %1147 = vsyncpa [#allocation5], 1

</llo_original>
